<compile_context>
chip_gen: v7x
topology: tpu7x:2x2x1
jax: 0.10.0
libtpu: 0.0.40
codegen_flags: <defaults>
</compile_context>

<pallas_src>
import functools

import jax
import jax.numpy as jnp
from jax.experimental import pallas as pl
from jax.experimental.pallas import tpu as pltpu


def _round_up(n, m):
    return ((n + m - 1) // m) * m


def _vmem_capacity_bytes():
    try:
        return int(pltpu.get_tpu_info().vmem_capacity_bytes)
    except Exception:
        return 64 << 20  # conservative (v7x physical VMEM per TC)


def mlp_kernel(x_ref, w1t_ref, b1_ref, w2t_ref, b2_ref, w3r_ref, b3_ref, o_ref):
    # x_ref is the native [TB, 8] tile (no wrapper transpose).
    x = x_ref[...]

    # Layer 1 as a transposed contraction: [64,8] x [TB,8]^T -> [64, TB]
    # (batch-on-lanes; Mosaic handles the operand transpose on the idle XLU).
    h1 = jax.lax.dot_general(
        w1t_ref[...], x,
        dimension_numbers=(((1,), (1,)), ((), ())),
        preferred_element_type=jnp.float32)
    h1 = jnp.maximum(h1 + b1_ref[...], 0.0)                     # [64, TB]

    # Layer 2: [32,64] @ [64,TB] -> [32,TB], +bias column, ReLU.
    h2 = jnp.dot(w2t_ref[...], h1, preferred_element_type=jnp.float32)
    h2 = jnp.maximum(h2 + b2_ref[...], 0.0)                     # [32, TB]

    # Layer 3 on the (idle) MXU: [1,32] @ [32,TB] -> lane-dense [1,TB],
    # then scalar bias (SMEM) + sigmoid.
    h3 = jnp.dot(w3r_ref[...], h2, preferred_element_type=jnp.float32)
    o_ref[...] = jax.nn.sigmoid(h3 + b3_ref[0, 0])


def prepare_params(params):
    """One-time layout prep: weights as [out, in], biases as columns / scalar."""
    return {
        "w1t": jnp.asarray(params["w1"]).T,                # [64, 8]
        "b1": jnp.asarray(params["b1"]).reshape(-1, 1),    # [64, 1]
        "w2t": jnp.asarray(params["w2"]).T,                # [32, 64]
        "b2": jnp.asarray(params["b2"]).reshape(-1, 1),    # [32, 1]
        "w3r": jnp.asarray(params["w3"]).reshape(1, -1),   # [1, 32]  (MXU row)
        "b3": jnp.asarray(params["b3"]).reshape(1, 1),     # [1, 1]   (SMEM scalar)
    }


@functools.partial(jax.jit, static_argnames=("tb",))
def multi_dim_model_forward(x, prepped, *, tb=16384):
    """x: [B, 8] float32. prepped: output of prepare_params. Returns [B, 1]."""
    B = x.shape[0]
    x = x.astype(jnp.float32)

    # --- Tile sizing ----------------------------------------------------------
    # Working-set estimate per sample of batch tile (conservative):
    #   x window [TB,8] f32 lane-padded to 128 -> 512 B, double-buffered -> 1024
    #   h1 [64,TB] f32 (x2 live temps) ~ 512, h2 [32,TB] ~ 256, xT/out misc ~ 50
    bytes_per_sample = 1900
    slack = 4 << 20                                   # weights + compiler scratch
    cap = (_vmem_capacity_bytes() * 3) // 4           # never request full physical
    max_tb = max(128, ((cap - slack) // bytes_per_sample) // 128 * 128)

    b128 = _round_up(max(B, 1), 128)
    tb_eff = min(_round_up(tb, 128), b128, max_tb)
    num_tiles = pl.cdiv(b128, tb_eff)
    # Prefer an even number of grid steps when >1 so ("parallel",) can shard
    # across both TensorCores on v7x.
    if num_tiles > 1 and num_tiles % 2 == 1:
        tb_eff = min(_round_up(pl.cdiv(b128, num_tiles + 1), 128), max_tb)
        num_tiles = pl.cdiv(b128, tb_eff)

    vmem_bytes = min(cap, tb_eff * bytes_per_sample + slack)
    vmem_bytes = max(vmem_bytes, 8 << 20)

    def const(shape):
        # Weight/bias blocks: constant index_map -> resident, DMA'd once.
        return pl.BlockSpec(shape, lambda i: (0, 0))

    out_t = pl.pallas_call(
        mlp_kernel,
        out_shape=jax.ShapeDtypeStruct((1, b128), jnp.float32),
        grid=(num_tiles,),
        in_specs=[
            pl.BlockSpec((tb_eff, 8), lambda i: (i, 0)),   # x, native layout
            const((64, 8)),                                # w1t
            const((64, 1)),                                # b1
            const((32, 64)),                               # w2t
            const((32, 1)),                                # b2
            const((1, 32)),                                # w3 row
            pl.BlockSpec(memory_space=pltpu.SMEM),         # b3 scalar in SMEM
        ],
        out_specs=pl.BlockSpec((1, tb_eff), lambda i: (0, i)),
        compiler_params=pltpu.CompilerParams(
            dimension_semantics=("parallel",),
            vmem_limit_bytes=int(vmem_bytes),
        ),
    )(x, prepped["w1t"], prepped["b1"], prepped["w2t"], prepped["b2"],
      prepped["w3r"], prepped["b3"])

    return out_t[0, :B].reshape(B, 1)                      # [B, 1]


def init_params(key):
    """Deterministic init matching nn.Linear shapes (weights stored as [in, out])."""
    ks = jax.random.split(key, 6)

    def linear_init(kw, kb, fan_in, fan_out):
        bound = 1.0 / jnp.sqrt(fan_in)
        w = jax.random.uniform(kw, (fan_in, fan_out), jnp.float32, -bound, bound)
        b = jax.random.uniform(kb, (fan_out,), jnp.float32, -bound, bound)
        return w, b

    w1, b1 = linear_init(ks[0], ks[1], 8, 64)
    w2, b2 = linear_init(ks[2], ks[3], 64, 32)
    w3, b3 = linear_init(ks[4], ks[5], 32, 1)
    return {"w1": w1, "b1": b1, "w2": w2, "b2": b2, "w3": w3, "b3": b3}


def _reference(x, params):
    h1 = jnp.maximum(x @ params["w1"] + params["b1"], 0.0)
    h2 = jnp.maximum(h1 @ params["w2"] + params["b2"], 0.0)
    return jax.nn.sigmoid(h2 @ params["w3"] + params["b3"])


if __name__ == "__main__":
    key = jax.random.PRNGKey(0)
    k_param, k_x = jax.random.split(key)

    params = init_params(k_param)
    prepped = prepare_params(params)                       # one-time layout prep

    # Small deterministic example: batch=16, features=8.
    x = jax.random.normal(k_x, (16, 8), dtype=jnp.float32)
    out = jax.block_until_ready(multi_dim_model_forward(x, prepped))
    ref = _reference(x, params)
    assert out.shape == (16, 1)
    assert jnp.allclose(out, ref, atol=1e-5), "mismatch vs reference"

    # Batch not a multiple of 128/tile: exercises the masked OOB tail path.
    x2 = jax.random.normal(jax.random.PRNGKey(1), (300, 8), dtype=jnp.float32)
    out2 = jax.block_until_ready(multi_dim_model_forward(x2, prepped))
    ref2 = _reference(x2, params)
    assert out2.shape == (300, 1)
    assert jnp.allclose(out2, ref2, atol=1e-5), "mismatch vs reference (tail)"

    print("KERNEL_OK")
</pallas_src>

<mosaic_0001>
module attributes {stable_mosaic.version = 11 : i64} {
  func.func @mlp_kernel(%arg0: i32, %arg1: memref<128x8xf32, #tpu.memory_space<vmem>>, %arg2: memref<64x8xf32, #tpu.memory_space<vmem>>, %arg3: memref<64x1xf32, #tpu.memory_space<vmem>>, %arg4: memref<32x64xf32, #tpu.memory_space<vmem>>, %arg5: memref<32x1xf32, #tpu.memory_space<vmem>>, %arg6: memref<1x32xf32, #tpu.memory_space<vmem>>, %arg7: memref<1x1xf32, #tpu.memory_space<smem>>, %arg8: memref<1x128xf32, #tpu.memory_space<vmem>>) attributes {dimension_semantics = [#tpu.dimension_semantics<parallel>], iteration_bounds = array<i64: 1>, scalar_prefetch = 0 : i64, scratch_operands = 0 : i64, tpu.core_type = #tpu.core_type<tc>, window_params = [{transform_indices = @transform_0, window_bounds = array<i64: 128, 8>}, {pipeline_mode = #tpu.pipeline_mode<synchronous>, transform_indices = @transform_1, window_bounds = array<i64: 64, 8>}, {pipeline_mode = #tpu.pipeline_mode<synchronous>, transform_indices = @transform_2, window_bounds = array<i64: 64, 1>}, {pipeline_mode = #tpu.pipeline_mode<synchronous>, transform_indices = @transform_3, window_bounds = array<i64: 32, 64>}, {pipeline_mode = #tpu.pipeline_mode<synchronous>, transform_indices = @transform_4, window_bounds = array<i64: 32, 1>}, {pipeline_mode = #tpu.pipeline_mode<synchronous>, transform_indices = @transform_5, window_bounds = array<i64: 1, 32>}, {transform_indices = @transform_6, window_bounds = array<i64: 1, 1>}, {transform_indices = @transform_7, window_bounds = array<i64: 1, 128>}]} {
    %c0 = arith.constant 0 : index
    %c0_0 = arith.constant 0 : index
    %0 = vector.load %arg1[%c0, %c0_0] : memref<128x8xf32, #tpu.memory_space<vmem>>, vector<128x8xf32>
    %c0_1 = arith.constant 0 : index
    %c0_2 = arith.constant 0 : index
    %1 = vector.load %arg2[%c0_1, %c0_2] : memref<64x8xf32, #tpu.memory_space<vmem>>, vector<64x8xf32>
    %cst = arith.constant dense<0.000000e+00> : vector<64x128xf32>
    %2 = tpu.matmul %1, %0, %cst {dimension_numbers = #tpu.dot_dimension_numbers<[1], [1], [0], [0], [0, 0, 1, 0], [], []>} : vector<64x8xf32>, vector<128x8xf32>, vector<64x128xf32> -> vector<64x128xf32>
    %c0_3 = arith.constant 0 : index
    %c0_4 = arith.constant 0 : index
    %3 = vector.load %arg3[%c0_3, %c0_4] : memref<64x1xf32, #tpu.memory_space<vmem>>, vector<64x1xf32>
    %4 = vector.broadcast %3 : vector<64x1xf32> to vector<64x128xf32>
    %5 = arith.addf %2, %4 : vector<64x128xf32>
    %cst_5 = arith.constant 0.000000e+00 : f32
    %6 = vector.broadcast %cst_5 : f32 to vector<64x128xf32>
    %7 = arith.maximumf %5, %6 : vector<64x128xf32>
    %c0_6 = arith.constant 0 : index
    %c0_7 = arith.constant 0 : index
    %8 = vector.load %arg4[%c0_6, %c0_7] : memref<32x64xf32, #tpu.memory_space<vmem>>, vector<32x64xf32>
    %cst_8 = arith.constant dense<0.000000e+00> : vector<32x128xf32>
    %9 = tpu.matmul %8, %7, %cst_8 {dimension_numbers = #tpu.dot_dimension_numbers<[1], [0], [0], [1], [0, 0, 1, 1], [], []>} : vector<32x64xf32>, vector<64x128xf32>, vector<32x128xf32> -> vector<32x128xf32>
    %c0_9 = arith.constant 0 : index
    %c0_10 = arith.constant 0 : index
    %10 = vector.load %arg5[%c0_9, %c0_10] : memref<32x1xf32, #tpu.memory_space<vmem>>, vector<32x1xf32>
    %11 = vector.broadcast %10 : vector<32x1xf32> to vector<32x128xf32>
    %12 = arith.addf %9, %11 : vector<32x128xf32>
    %cst_11 = arith.constant 0.000000e+00 : f32
    %13 = vector.broadcast %cst_11 : f32 to vector<32x128xf32>
    %14 = arith.maximumf %12, %13 : vector<32x128xf32>
    %c0_12 = arith.constant 0 : index
    %c0_13 = arith.constant 0 : index
    %15 = vector.load %arg6[%c0_12, %c0_13] : memref<1x32xf32, #tpu.memory_space<vmem>>, vector<1x32xf32>
    %cst_14 = arith.constant dense<0.000000e+00> : vector<1x128xf32>
    %16 = tpu.matmul %15, %14, %cst_14 {dimension_numbers = #tpu.dot_dimension_numbers<[1], [0], [0], [1], [0, 0, 1, 1], [], []>} : vector<1x32xf32>, vector<32x128xf32>, vector<1x128xf32> -> vector<1x128xf32>
    %c0_15 = arith.constant 0 : index
    %c0_16 = arith.constant 0 : index
    %17 = memref.load %arg7[%c0_15, %c0_16] : memref<1x1xf32, #tpu.memory_space<smem>>
    %18 = vector.broadcast %17 : f32 to vector<1x128xf32>
    %19 = arith.addf %16, %18 : vector<1x128xf32>
    %20 = arith.negf %19 : vector<1x128xf32>
    %21 = math.exp %20 : vector<1x128xf32>
    %cst_17 = arith.constant 1.000000e+00 : f32
    %22 = vector.broadcast %cst_17 : f32 to vector<1x128xf32>
    %23 = arith.addf %22, %21 : vector<1x128xf32>
    %24 = arith.divf %22, %23 : vector<1x128xf32>
    %c0_18 = arith.constant 0 : index
    %c0_19 = arith.constant 0 : index
    %25 = vector.load %arg8[%c0_18, %c0_19] : memref<1x128xf32, #tpu.memory_space<vmem>>, vector<1x128xf32>
    tpu.vector_store %arg8[%c0_18, %c0_19], %24 {strides = array<i32>} : memref<1x128xf32, #tpu.memory_space<vmem>>, vector<1x128xf32>,
    return
  }
  func.func @transform_0(%arg0: i32) -> (i32, i32) {
    %c0_i32 = arith.constant 0 : i32
    %c0_i32_0 = arith.constant 0 : i32
    return %arg0, %c0_i32 : i32, i32
  }
  func.func @transform_1(%arg0: i32) -> (i32, i32) {
    %c0_i32 = arith.constant 0 : i32
    %c0_i32_0 = arith.constant 0 : i32
    %c0_i32_1 = arith.constant 0 : i32
    return %c0_i32, %c0_i32_0 : i32, i32
  }
  func.func @transform_2(%arg0: i32) -> (i32, i32) {
    %c0_i32 = arith.constant 0 : i32
    %c0_i32_0 = arith.constant 0 : i32
    %c0_i32_1 = arith.constant 0 : i32
    return %c0_i32, %c0_i32_0 : i32, i32
  }
  func.func @transform_3(%arg0: i32) -> (i32, i32) {
    %c0_i32 = arith.constant 0 : i32
    %c0_i32_0 = arith.constant 0 : i32
    %c0_i32_1 = arith.constant 0 : i32
    return %c0_i32, %c0_i32_0 : i32, i32
  }
  func.func @transform_4(%arg0: i32) -> (i32, i32) {
    %c0_i32 = arith.constant 0 : i32
    %c0_i32_0 = arith.constant 0 : i32
    %c0_i32_1 = arith.constant 0 : i32
    return %c0_i32, %c0_i32_0 : i32, i32
  }
  func.func @transform_5(%arg0: i32) -> (i32, i32) {
    %c0_i32 = arith.constant 0 : i32
    %c0_i32_0 = arith.constant 0 : i32
    %c0_i32_1 = arith.constant 0 : i32
    return %c0_i32, %c0_i32_0 : i32, i32
  }
  func.func @transform_6(%arg0: i32) -> (i32, i32) {
    %c0_i32 = arith.constant 0 : i32
    %c0_i32_0 = arith.constant 0 : i32
    %c0_i32_1 = arith.constant 0 : i32
    return %c0_i32, %c0_i32_0 : i32, i32
  }
  func.func @transform_7(%arg0: i32) -> (i32, i32) {
    %c0_i32 = arith.constant 0 : i32
    %c0_i32_0 = arith.constant 0 : i32
    return %c0_i32, %arg0 : i32, i32
  }
}

</mosaic_0001>

<llo_original>
// kernel: multi_dim_model_forward.1
$region0: #{multi_dim_model_forward.1}
  #allocation0 [shape = 'u32[]', space=smem, size = 0x4, offset = 0x4, fixed_abs, tag = 'smem constant byte address 0x4 - core index']
  #allocation1 [shape = 'u32[144,128]{1,0:T(1,128)}', space=vmem, size = 0x12000, scoped, tag = 'internal scratch']
  #allocation2 [shape = 'f32[1,1]{1,0:T(1,128)S(6)}', space=smem, size = 0x200, scoped, tag = 'scoped memory for multi_dim_model_forward.1']
  %s0 = inlined_call_operand.vmem [shape: f32[16,8], index: 0, kind: input, shape index: {}]
  %s1 = inlined_call_operand.vmem [shape: f32[64,8], index: 1, kind: input, shape index: {}]
  %s2 = inlined_call_operand.vmem [shape: f32[64,1], index: 2, kind: input, shape index: {}]
  %s3 = inlined_call_operand.vmem [shape: f32[32,64], index: 3, kind: input, shape index: {}]
  %s4 = inlined_call_operand.vmem [shape: f32[32,1], index: 4, kind: input, shape index: {}]
  %s5 = inlined_call_operand.vmem [shape: f32[1,32], index: 5, kind: input, shape index: {}]
  %s6 = inlined_call_operand.<no memory space> [shape: f32[1,1], index: 6, kind: input, shape index: {}]
  %s7 = inlined_call_operand.vmem [shape: f32[1,128], index: 7, kind: output, shape index: {}]
  %s8 = sld [smem:[#allocation0]]
  $region38: #{multi_dim_model_forward.1} parent=0
    _
  %s10 = ssub.s32 1, %s8
  %s11 = scalar_select 0, %s10, %s8
  %12 = sst [smem:[#allocation2]] %s6
  // Predicated region
  $region2: #{multi_dim_model_forward.1} parent=0 // pred_check
    _
  $region3: #{multi_dim_model_forward.1} parent=0 // pred_check_branch
    %14 = sbr.rel (0) target = $region5
  $region4: #{multi_dim_model_forward.1} parent=0 // pred_region
    _
  $region5: #{multi_dim_model_forward.1} parent=0 // pred_fallthru
    _
  // Predicated region
  $region6: #{multi_dim_model_forward.1} parent=0 // pred_check
    _
  $region7: #{multi_dim_model_forward.1} parent=0 // pred_check_branch
    %16 = sbr.rel (0) target = $region9
  $region8: #{multi_dim_model_forward.1} parent=0 // pred_region
    _
  $region9: #{multi_dim_model_forward.1} parent=0 // pred_fallthru
    _
  // Predicated region
  $region10: #{multi_dim_model_forward.1} parent=0 // pred_check
    _
  $region11: #{multi_dim_model_forward.1} parent=0 // pred_check_branch
    %18 = sbr.rel (0) target = $region13
  $region12: #{multi_dim_model_forward.1} parent=0 // pred_region
    _
  $region13: #{multi_dim_model_forward.1} parent=0 // pred_fallthru
    _
  // Predicated region
  $region14: #{multi_dim_model_forward.1} parent=0 // pred_check
    _
  $region15: #{multi_dim_model_forward.1} parent=0 // pred_check_branch
    %20 = sbr.rel (0) target = $region17
  $region16: #{multi_dim_model_forward.1} parent=0 // pred_region
    _
  $region17: #{multi_dim_model_forward.1} parent=0 // pred_fallthru
    _
  // Predicated region
  $region18: #{multi_dim_model_forward.1} parent=0 // pred_check
    _
  $region19: #{multi_dim_model_forward.1} parent=0 // pred_check_branch
    %22 = sbr.rel (0) target = $region21
  $region20: #{multi_dim_model_forward.1} parent=0 // pred_region
    _
  $region21: #{multi_dim_model_forward.1} parent=0 // pred_fallthru
    _
  // Predicated region
  $region22: #{multi_dim_model_forward.1} parent=0 // pred_check
    _
  $region23: #{multi_dim_model_forward.1} parent=0 // pred_check_branch
    %24 = sbr.rel (0) target = $region25
  $region24: #{multi_dim_model_forward.1} parent=0 // pred_region
    _
  $region25: #{multi_dim_model_forward.1} parent=0 // pred_fallthru
    _
  // Predicated region
  $region26: #{multi_dim_model_forward.1} parent=0 // pred_check
    _
  $region27: #{multi_dim_model_forward.1} parent=0 // pred_check_branch
    %26 = sbr.rel (0) target = $region29
  $region28: #{multi_dim_model_forward.1} parent=0 // pred_region
    _
  $region29: #{multi_dim_model_forward.1} parent=0 // pred_fallthru
    _
  %v27 = vld [vmem:[%s0] sm:$0xff]
  %v28 = vld [vmem:[%s0 + $0x8] sm:$0xff]
  %v29 = vld [vmem:[%s0 + $0x10] sm:$0xff]
  %v30 = vld [vmem:[%s0 + $0x18] sm:$0xff]
  %v31 = vld [vmem:[%s0 + $0x20] sm:$0xff]
  %v32 = vld [vmem:[%s0 + $0x28] sm:$0xff]
  %v33 = vld [vmem:[%s0 + $0x30] sm:$0xff]
  %v34 = vld [vmem:[%s0 + $0x38] sm:$0xff]
  %v35 = vld [vmem:[%s0 + $0x40] sm:$0xff]
  %v36 = vld [vmem:[%s0 + $0x48] sm:$0xff]
  %v37 = vld [vmem:[%s0 + $0x50] sm:$0xff]
  %v38 = vld [vmem:[%s0 + $0x58] sm:$0xff]
  %v39 = vld [vmem:[%s0 + $0x60] sm:$0xff]
  %v40 = vld [vmem:[%s0 + $0x68] sm:$0xff]
  %v41 = vld [vmem:[%s0 + $0x70] sm:$0xff]
  %v42 = vld [vmem:[%s0 + $0x78] sm:$0xff]
  %v43 = vld [vmem:[%s1] sm:$0xff]
  %v44 = vld [vmem:[%s1 + $0x8] sm:$0xff]
  %v45 = vld [vmem:[%s1 + $0x10] sm:$0xff]
  %v46 = vld [vmem:[%s1 + $0x18] sm:$0xff]
  %v47 = vld [vmem:[%s1 + $0x20] sm:$0xff]
  %v48 = vld [vmem:[%s1 + $0x28] sm:$0xff]
  %v49 = vld [vmem:[%s1 + $0x30] sm:$0xff]
  %v50 = vld [vmem:[%s1 + $0x38] sm:$0xff]
  %v51 = vld [vmem:[%s2] sm:$0xff]
  %v52 = vld [vmem:[%s2 + $0x8] sm:$0xff]
  %v53 = vld [vmem:[%s2 + $0x10] sm:$0xff]
  %v54 = vld [vmem:[%s2 + $0x18] sm:$0xff]
  %v55 = vld [vmem:[%s2 + $0x20] sm:$0xff]
  %v56 = vld [vmem:[%s2 + $0x28] sm:$0xff]
  %v57 = vld [vmem:[%s2 + $0x30] sm:$0xff]
  %v58 = vld [vmem:[%s2 + $0x38] sm:$0xff]
  %60 = vset.pattern.permute.xlu0 0
  %61 = vperm.xlu0 %60, %v51
  %v62 = vpop.permute.xlu0 %61
  %65 = vset.pattern.permute.xlu0 0
  %66 = vperm.xlu0 %65, %v52
  %v67 = vpop.permute.xlu0 %66
  %70 = vset.pattern.permute.xlu0 0
  %71 = vperm.xlu0 %70, %v53
  %v72 = vpop.permute.xlu0 %71
  %75 = vset.pattern.permute.xlu0 0
  %76 = vperm.xlu0 %75, %v54
  %v77 = vpop.permute.xlu0 %76
  %80 = vset.pattern.permute.xlu0 0
  %81 = vperm.xlu0 %80, %v55
  %v82 = vpop.permute.xlu0 %81
  %85 = vset.pattern.permute.xlu0 0
  %86 = vperm.xlu0 %85, %v56
  %v87 = vpop.permute.xlu0 %86
  %90 = vset.pattern.permute.xlu0 0
  %91 = vperm.xlu0 %90, %v57
  %v92 = vpop.permute.xlu0 %91
  %95 = vset.pattern.permute.xlu0 0
  %96 = vperm.xlu0 %95, %v58
  %v97 = vpop.permute.xlu0 %96
  %vm99 = vcmask 64512
  %v101 = vsel %vm99, %v43, 0
  %v104 = vsel %vm99, %v44, 0
  %v107 = vsel %vm99, %v45, 0
  %v110 = vsel %vm99, %v46, 0
  %v113 = vsel %vm99, %v47, 0
  %v116 = vsel %vm99, %v48, 0
  %v119 = vsel %vm99, %v49, 0
  %v122 = vsel %vm99, %v50, 0
  %v125 = vsel %vm99, %v27, 0
  %v128 = vsel %vm99, %v28, 0
  %v131 = vsel %vm99, %v29, 0
  %v134 = vsel %vm99, %v30, 0
  %v137 = vsel %vm99, %v31, 0
  %v140 = vsel %vm99, %v32, 0
  %v143 = vsel %vm99, %v33, 0
  %v146 = vsel %vm99, %v34, 0
  %v149 = vsel %vm99, %v35, 0
  %v152 = vsel %vm99, %v36, 0
  %v155 = vsel %vm99, %v37, 0
  %v158 = vsel %vm99, %v38, 0
  %v161 = vsel %vm99, %v39, 0
  %v164 = vsel %vm99, %v40, 0
  %v167 = vsel %vm99, %v41, 0
  %v170 = vsel %vm99, %v42, 0
  %172 = vmatprep.subr.mxu0 0.0
  %173 = vmatpush1.xpose.msra.mxu0 %v125
  %174 = vmatprep.subr.mxu0 0.0
  %175 = vmatpush1.xpose.msra.mxu0 %v128
  %176 = vmatprep.subr.mxu0 0.0
  %177 = vmatpush1.xpose.msra.mxu0 %v131
  %178 = vmatprep.subr.mxu0 0.0
  %179 = vmatpush1.xpose.msra.mxu0 %v134
  %180 = vmatprep.subr.mxu0 0.0
  %181 = vmatpush1.xpose.msra.mxu0 %v137
  %182 = vmatprep.subr.mxu0 0.0
  %183 = vmatpush1.xpose.msra.mxu0 %v140
  %184 = vmatprep.subr.mxu0 0.0
  %185 = vmatpush1.xpose.msra.mxu0 %v143
  %186 = vmatprep.subr.mxu0 0.0
  %187 = vmatpush1.xpose.msra.mxu0 %v146
  %188 = vmatprep.subr.mxu0 0.0
  %189 = vmatpush1.xpose.msra.mxu0 %v149
  %190 = vmatprep.subr.mxu0 0.0
  %191 = vmatpush1.xpose.msra.mxu0 %v152
  %192 = vmatprep.subr.mxu0 0.0
  %193 = vmatpush1.xpose.msra.mxu0 %v155
  %194 = vmatprep.subr.mxu0 0.0
  %195 = vmatpush1.xpose.msra.mxu0 %v158
  %196 = vmatprep.subr.mxu0 0.0
  %197 = vmatpush1.xpose.msra.mxu0 %v161
  %198 = vmatprep.subr.mxu0 0.0
  %199 = vmatpush1.xpose.msra.mxu0 %v164
  %200 = vmatprep.subr.mxu0 0.0
  %201 = vmatpush1.xpose.msra.mxu0 %v167
  %202 = vmatprep.subr.mxu0 0.0
  %203 = vmatpush1.xpose.msra.mxu0 %v170
  %204 = vmatprep.subr.mxu0 0.0
  %205 = vmatpush1.xpose.msra.mxu0 0.0
  %206 = vmatprep.subr.mxu0 0.0
  %207 = vmatpush1.xpose.msra.mxu0 0.0
  %208 = vmatprep.subr.mxu0 0.0
  %209 = vmatpush1.xpose.msra.mxu0 0.0
  %210 = vmatprep.subr.mxu0 0.0
  %211 = vmatpush1.xpose.msra.mxu0 0.0
  %212 = vmatprep.subr.mxu0 0.0
  %213 = vmatpush1.xpose.msra.mxu0 0.0
  %214 = vmatprep.subr.mxu0 0.0
  %215 = vmatpush1.xpose.msra.mxu0 0.0
  %216 = vmatprep.subr.mxu0 0.0
  %217 = vmatpush1.xpose.msra.mxu0 0.0
  %218 = vmatprep.subr.mxu0 0.0
  %219 = vmatpush1.xpose.msra.mxu0 0.0
  %220 = vmatprep.subr.mxu0 0.0
  %221 = vmatpush1.xpose.msra.mxu0 0.0
  %222 = vmatprep.subr.mxu0 0.0
  %223 = vmatpush1.xpose.msra.mxu0 0.0
  %224 = vmatprep.subr.mxu0 0.0
  %225 = vmatpush1.xpose.msra.mxu0 0.0
  %226 = vmatprep.subr.mxu0 0.0
  %227 = vmatpush1.xpose.msra.mxu0 0.0
  %228 = vmatprep.subr.mxu0 0.0
  %229 = vmatpush1.xpose.msra.mxu0 0.0
  %230 = vmatprep.subr.mxu0 0.0
  %231 = vmatpush1.xpose.msra.mxu0 0.0
  %232 = vmatprep.subr.mxu0 0.0
  %233 = vmatpush1.xpose.msra.mxu0 0.0
  %234 = vmatprep.subr.mxu0 0.0
  %235 = vmatpush1.xpose.msra.mxu0 0.0
  %236 = vmatprep.mubr.f32.mxu0 0.0
  %237 = vmatmul.mubr.f32.gmra.mrb[0].mxu0 %v101
  %v238 = vpop.f32.mrb[0].mxu0
  %v239 = vadd.f32 %v62, %v238
  %v240 = vpop.f32.mrb[0].mxu0
  %241 = vmatprep.mubr.f32.mxu0 0.0
  %242 = vmatmul.mubr.f32.gmra.mrb[0].mxu0 %v104
  %v243 = vpop.f32.mrb[0].mxu0
  %v244 = vadd.f32 %v67, %v243
  %v245 = vpop.f32.mrb[0].mxu0
  %246 = vmatprep.mubr.f32.mxu0 0.0
  %247 = vmatmul.mubr.f32.gmra.mrb[0].mxu0 %v107
  %v248 = vpop.f32.mrb[0].mxu0
  %v249 = vadd.f32 %v72, %v248
  %v250 = vpop.f32.mrb[0].mxu0
  %251 = vmatprep.mubr.f32.mxu0 0.0
  %252 = vmatmul.mubr.f32.gmra.mrb[0].mxu0 %v110
  %v253 = vpop.f32.mrb[0].mxu0
  %v254 = vadd.f32 %v77, %v253
  %v255 = vpop.f32.mrb[0].mxu0
  %256 = vmatprep.mubr.f32.mxu0 0.0
  %257 = vmatmul.mubr.f32.gmra.mrb[0].mxu0 %v113
  %v258 = vpop.f32.mrb[0].mxu0
  %v259 = vadd.f32 %v82, %v258
  %v260 = vpop.f32.mrb[0].mxu0
  %261 = vmatprep.mubr.f32.mxu0 0.0
  %262 = vmatmul.mubr.f32.gmra.mrb[0].mxu0 %v116
  %v263 = vpop.f32.mrb[0].mxu0
  %v264 = vadd.f32 %v87, %v263
  %v265 = vpop.f32.mrb[0].mxu0
  %266 = vmatprep.mubr.f32.mxu0 0.0
  %267 = vmatmul.mubr.f32.gmra.mrb[0].mxu0 %v119
  %v268 = vpop.f32.mrb[0].mxu0
  %v269 = vadd.f32 %v92, %v268
  %v270 = vpop.f32.mrb[0].mxu0
  %271 = vmatprep.mubr.f32.mxu0 0.0
  %272 = vmatmul.mubr.f32.gmra.mrb[0].mxu0 %v122
  %v273 = vpop.f32.mrb[0].mxu0
  %v274 = vadd.f32 %v97, %v273
  %v275 = vpop.f32.mrb[0].mxu0
  %276 = vdwg.mxu0
  %v277 = vmax.f32 %v239, 0.0
  %v278 = vmax.f32 %v244, 0.0
  %v279 = vmax.f32 %v249, 0.0
  %v280 = vmax.f32 %v254, 0.0
  %v281 = vmax.f32 %v259, 0.0
  %v282 = vmax.f32 %v264, 0.0
  %v283 = vmax.f32 %v269, 0.0
  %v284 = vmax.f32 %v274, 0.0
  %v285 = vld [vmem:[%s3] sm:$0xff]
  %v286 = vld [vmem:[%s3 + $0x8] sm:$0xff]
  %v287 = vld [vmem:[%s3 + $0x10] sm:$0xff]
  %v288 = vld [vmem:[%s3 + $0x18] sm:$0xff]
  %v289 = vld [vmem:[%s4] sm:$0xff]
  %v290 = vld [vmem:[%s4 + $0x8] sm:$0xff]
  %v291 = vld [vmem:[%s4 + $0x10] sm:$0xff]
  %v292 = vld [vmem:[%s4 + $0x18] sm:$0xff]
  %294 = vset.pattern.permute.xlu0 0
  %295 = vperm.xlu0 %294, %v289
  %v296 = vpop.permute.xlu0 %295
  %299 = vset.pattern.permute.xlu0 0
  %300 = vperm.xlu0 %299, %v290
  %v301 = vpop.permute.xlu0 %300
  %304 = vset.pattern.permute.xlu0 0
  %305 = vperm.xlu0 %304, %v291
  %v306 = vpop.permute.xlu0 %305
  %309 = vset.pattern.permute.xlu0 0
  %310 = vperm.xlu0 %309, %v292
  %v311 = vpop.permute.xlu0 %310
  %vm313 = vcmask 523264
  %v315 = vsel %vm313, %v285, 0
  %v318 = vsel %vm313, %v286, 0
  %v321 = vsel %vm313, %v287, 0
  %v324 = vsel %vm313, %v288, 0
  %326 = vmatprep.subr.mxu0 0.0
  %327 = vmatpush1.msra.mxu0 %v277
  %328 = vmatprep.subr.mxu0 0.0
  %329 = vmatpush1.msra.mxu0 %v278
  %330 = vmatprep.subr.mxu0 0.0
  %331 = vmatpush1.msra.mxu0 %v279
  %332 = vmatprep.subr.mxu0 0.0
  %333 = vmatpush1.msra.mxu0 %v280
  %334 = vmatprep.subr.mxu0 0.0
  %335 = vmatpush1.msra.mxu0 %v281
  %336 = vmatprep.subr.mxu0 0.0
  %337 = vmatpush1.msra.mxu0 %v282
  %338 = vmatprep.subr.mxu0 0.0
  %339 = vmatpush1.msra.mxu0 %v283
  %340 = vmatprep.subr.mxu0 0.0
  %341 = vmatpush1.msra.mxu0 %v284
  %342 = vmatprep.subr.mxu0 0.0
  %343 = vmatpush1.msra.mxu0 0.0
  %344 = vmatprep.subr.mxu0 0.0
  %345 = vmatpush1.msra.mxu0 0.0
  %346 = vmatprep.subr.mxu0 0.0
  %347 = vmatpush1.msra.mxu0 0.0
  %348 = vmatprep.subr.mxu0 0.0
  %349 = vmatpush1.msra.mxu0 0.0
  %350 = vmatprep.subr.mxu0 0.0
  %351 = vmatpush1.msra.mxu0 0.0
  %352 = vmatprep.subr.mxu0 0.0
  %353 = vmatpush1.msra.mxu0 0.0
  %354 = vmatprep.subr.mxu0 0.0
  %355 = vmatpush1.msra.mxu0 0.0
  %356 = vmatprep.subr.mxu0 0.0
  %357 = vmatpush1.msra.mxu0 0.0
  %358 = vmatprep.subr.mxu0 0.0
  %359 = vmatpush1.msra.mxu0 0.0
  %360 = vmatprep.subr.mxu0 0.0
  %361 = vmatpush1.msra.mxu0 0.0
  %362 = vmatprep.subr.mxu0 0.0
  %363 = vmatpush1.msra.mxu0 0.0
  %364 = vmatprep.subr.mxu0 0.0
  %365 = vmatpush1.msra.mxu0 0.0
  %366 = vmatprep.subr.mxu0 0.0
  %367 = vmatpush1.msra.mxu0 0.0
  %368 = vmatprep.subr.mxu0 0.0
  %369 = vmatpush1.msra.mxu0 0.0
  %370 = vmatprep.subr.mxu0 0.0
  %371 = vmatpush1.msra.mxu0 0.0
  %372 = vmatprep.subr.mxu0 0.0
  %373 = vmatpush1.msra.mxu0 0.0
  %374 = vmatprep.subr.mxu0 0.0
  %375 = vmatpush1.msra.mxu0 0.0
  %376 = vmatprep.subr.mxu0 0.0
  %377 = vmatpush1.msra.mxu0 0.0
  %378 = vmatprep.subr.mxu0 0.0
  %379 = vmatpush1.msra.mxu0 0.0
  %380 = vmatprep.subr.mxu0 0.0
  %381 = vmatpush1.msra.mxu0 0.0
  %382 = vmatprep.subr.mxu0 0.0
  %383 = vmatpush1.msra.mxu0 0.0
  %384 = vmatprep.subr.mxu0 0.0
  %385 = vmatpush1.msra.mxu0 0.0
  %386 = vmatprep.subr.mxu0 0.0
  %387 = vmatpush1.msra.mxu0 0.0
  %388 = vmatprep.subr.mxu0 0.0
  %389 = vmatpush1.msra.mxu0 0.0
  %390 = vmatprep.mubr.f32.mxu0 0.0
  %391 = vmatmul.mubr.f32.gmra.mrb[0].mxu0 %v315
  %v392 = vpop.f32.mrb[0].mxu0
  %v393 = vadd.f32 %v296, %v392
  %v394 = vpop.f32.mrb[0].mxu0
  %395 = vmatprep.mubr.f32.mxu0 0.0
  %396 = vmatmul.mubr.f32.gmra.mrb[0].mxu0 %v318
  %v397 = vpop.f32.mrb[0].mxu0
  %v398 = vadd.f32 %v301, %v397
  %v399 = vpop.f32.mrb[0].mxu0
  %400 = vmatprep.mubr.f32.mxu0 0.0
  %401 = vmatmul.mubr.f32.gmra.mrb[0].mxu0 %v321
  %v402 = vpop.f32.mrb[0].mxu0
  %v403 = vadd.f32 %v306, %v402
  %v404 = vpop.f32.mrb[0].mxu0
  %405 = vmatprep.mubr.f32.mxu0 0.0
  %406 = vmatmul.mubr.f32.gmra.mrb[0].mxu0 %v324
  %v407 = vpop.f32.mrb[0].mxu0
  %v408 = vadd.f32 %v311, %v407
  %v409 = vpop.f32.mrb[0].mxu0
  %410 = vdwg.mxu0
  %v411 = vmax.f32 %v393, 0.0
  %v412 = vmax.f32 %v398, 0.0
  %v413 = vmax.f32 %v403, 0.0
  %v414 = vmax.f32 %v408, 0.0
  %v415 = vld [vmem:[%s5] sm:$0x1]
  %s416 = sld [smem:[#allocation2]]
  %v417 = vstv %s416
  %vm418 = vcmask 261120
  %v420 = vsel %vm418, %v415, 0
  %422 = vmatprep.subr.mxu0 0.0
  %423 = vmatpush1.msra.mxu0 %v411
  %424 = vmatprep.subr.mxu0 0.0
  %425 = vmatpush1.msra.mxu0 %v412
  %426 = vmatprep.subr.mxu0 0.0
  %427 = vmatpush1.msra.mxu0 %v413
  %428 = vmatprep.subr.mxu0 0.0
  %429 = vmatpush1.msra.mxu0 %v414
  %430 = vmatprep.subr.mxu0 0.0
  %431 = vmatpush1.msra.mxu0 0.0
  %432 = vmatprep.subr.mxu0 0.0
  %433 = vmatpush1.msra.mxu0 0.0
  %434 = vmatprep.subr.mxu0 0.0
  %435 = vmatpush1.msra.mxu0 0.0
  %436 = vmatprep.subr.mxu0 0.0
  %437 = vmatpush1.msra.mxu0 0.0
  %438 = vmatprep.subr.mxu0 0.0
  %439 = vmatpush1.msra.mxu0 0.0
  %440 = vmatprep.subr.mxu0 0.0
  %441 = vmatpush1.msra.mxu0 0.0
  %442 = vmatprep.subr.mxu0 0.0
  %443 = vmatpush1.msra.mxu0 0.0
  %444 = vmatprep.subr.mxu0 0.0
  %445 = vmatpush1.msra.mxu0 0.0
  %446 = vmatprep.subr.mxu0 0.0
  %447 = vmatpush1.msra.mxu0 0.0
  %448 = vmatprep.subr.mxu0 0.0
  %449 = vmatpush1.msra.mxu0 0.0
  %450 = vmatprep.subr.mxu0 0.0
  %451 = vmatpush1.msra.mxu0 0.0
  %452 = vmatprep.subr.mxu0 0.0
  %453 = vmatpush1.msra.mxu0 0.0
  %454 = vmatprep.subr.mxu0 0.0
  %455 = vmatpush1.msra.mxu0 0.0
  %456 = vmatprep.subr.mxu0 0.0
  %457 = vmatpush1.msra.mxu0 0.0
  %458 = vmatprep.subr.mxu0 0.0
  %459 = vmatpush1.msra.mxu0 0.0
  %460 = vmatprep.subr.mxu0 0.0
  %461 = vmatpush1.msra.mxu0 0.0
  %462 = vmatprep.subr.mxu0 0.0
  %463 = vmatpush1.msra.mxu0 0.0
  %464 = vmatprep.subr.mxu0 0.0
  %465 = vmatpush1.msra.mxu0 0.0
  %466 = vmatprep.subr.mxu0 0.0
  %467 = vmatpush1.msra.mxu0 0.0
  %468 = vmatprep.subr.mxu0 0.0
  %469 = vmatpush1.msra.mxu0 0.0
  %470 = vmatprep.subr.mxu0 0.0
  %471 = vmatpush1.msra.mxu0 0.0
  %472 = vmatprep.subr.mxu0 0.0
  %473 = vmatpush1.msra.mxu0 0.0
  %474 = vmatprep.subr.mxu0 0.0
  %475 = vmatpush1.msra.mxu0 0.0
  %476 = vmatprep.subr.mxu0 0.0
  %477 = vmatpush1.msra.mxu0 0.0
  %478 = vmatprep.subr.mxu0 0.0
  %479 = vmatpush1.msra.mxu0 0.0
  %480 = vmatprep.subr.mxu0 0.0
  %481 = vmatpush1.msra.mxu0 0.0
  %482 = vmatprep.subr.mxu0 0.0
  %483 = vmatpush1.msra.mxu0 0.0
  %484 = vmatprep.subr.mxu0 0.0
  %485 = vmatpush1.msra.mxu0 0.0
  %486 = vmatprep.mubr.f32.mxu0 0.0
  %487 = vmatmul.mubr.f32.gmra.mrb[0].mxu0 %v420
  %v488 = vpop.f32.mrb[0].mxu0
  %v489 = vadd.f32 %v417, %v488
  %v490 = vpop.f32.mrb[0].mxu0
  %491 = vdwg.mxu0
  %v492 = vxor.u32 %v489, 2147483648
  %v493 = vmul.f32 %v492, 1.442695
  %v494 = vpow.pop %v493
  %v495 = vadd.f32 %v494, 1.0
  %v496 = vrcp.pop %v495
  %v497 = vmul.f32 1.0, %v496
  %498 = vst [vmem:[%s7] sm:$0x1] %v497
  // Predicated region
  $region30: #{multi_dim_model_forward.1} parent=0 // pred_check
    _
  $region31: #{multi_dim_model_forward.1} parent=0 // pred_check_branch
    %500 = sbr.rel (0) target = $region33
  $region32: #{multi_dim_model_forward.1} parent=0 // pred_region
    _
  $region33: #{multi_dim_model_forward.1} parent=0 // pred_fallthru
    _
  // Predicated region
  $region34: #{multi_dim_model_forward.1} parent=0 // pred_check
    _
  $region35: #{multi_dim_model_forward.1} parent=0 // pred_check_branch
    %502 = sbr.rel (0) target = $region37
  $region36: #{multi_dim_model_forward.1} parent=0 // pred_region
    _
  $region37: #{multi_dim_model_forward.1} parent=0 // pred_fallthru
    _

</llo_original>
